<compile_context>
chip_gen: v5e
topology: v5e:2x2
jax: 0.10.0
libtpu: 0.0.40
codegen_flags: <defaults>
</compile_context>

<pallas_src>
import functools
import math

import jax
import jax.numpy as jnp
from jax.experimental import pallas as pl
from jax.experimental.pallas import tpu as pltpu


_ALIGN_N = 256            # weight/LN feature padding -> tn=256..1024 reachable (v6e/v7x MXU)
_MAX_TK = 2304            # single-K-step threshold (covers every K in this model)
_VMEM_LIMIT = 32 * 1024 * 1024


def _round_up(x, m):
    return (x + m - 1) // m * m


def _largest_tile(dim, unit, cap):
    best = unit
    for t in range(unit, min(dim, cap) + 1, unit):
        if dim % t == 0:
            best = t
    return best


def _pick_tm(m):
    return 256 if m >= 256 else _round_up(m, 8)


def _pick_tn(np_):
    for cand in (1024, 768, 512, 256):
        if np_ % cand == 0:
            return cand
    return 128


# ---------------------------------------------------------------------------
# Kernel 1: matmul (bf16 x bf16 -> f32 acc) + bias (+ activation), bf16 out
# ---------------------------------------------------------------------------
def _matmul_bias_kernel(x_ref, w_ref, b_ref, o_ref, *, activation):
    out = jnp.dot(x_ref[...], w_ref[...],
                  preferred_element_type=jnp.float32) + b_ref[...]
    if activation == "relu":
        out = jnp.maximum(out, 0.0)
    elif activation == "gelu":
        out = jax.nn.gelu(out, approximate=True)
    o_ref[...] = out.astype(o_ref.dtype)


def _matmul_acc_kernel(x_ref, w_ref, b_ref, o_ref, acc_ref, *, activation):
    # Fallback path for K larger than one VMEM tile (not hit at current model dims).
    @pl.when(pl.program_id(2) == 0)
    def _():
        acc_ref[...] = jnp.zeros_like(acc_ref)

    acc_ref[...] += jnp.dot(x_ref[...], w_ref[...],
                            preferred_element_type=jnp.float32)

    @pl.when(pl.program_id(2) == pl.num_programs(2) - 1)
    def _():
        out = acc_ref[...] + b_ref[...]
        if activation == "relu":
            out = jnp.maximum(out, 0.0)
        elif activation == "gelu":
            out = jax.nn.gelu(out, approximate=True)
        o_ref[...] = out.astype(o_ref.dtype)


@functools.partial(jax.jit, static_argnames=("n", "activation"))
def _linear_impl(x, wp, bp, *, n, activation):
    """y = act(x @ W + b).  wp: pre-padded bf16 (Kp, Np); bp: pre-padded f32 (1, Np)."""
    orig_shape = x.shape
    K = orig_shape[-1]
    Kp, Np = wp.shape

    x2 = x.reshape(-1, K).astype(jnp.bfloat16)
    M = x2.shape[0]
    tm = _pick_tm(M)
    Mp = _round_up(M, tm)
    if Kp != K or Mp != M:
        xp = jnp.zeros((Mp, Kp), jnp.bfloat16).at[:M, :K].set(x2)
    else:
        xp = x2

    tn = _pick_tn(Np)

    if Kp <= _MAX_TK:
        out = pl.pallas_call(
            functools.partial(_matmul_bias_kernel, activation=activation),
            out_shape=jax.ShapeDtypeStruct((Mp, Np), jnp.bfloat16),
            grid_spec=pltpu.PrefetchScalarGridSpec(
                num_scalar_prefetch=0,
                grid=(Mp // tm, Np // tn),
                in_specs=[
                    pl.BlockSpec((tm, Kp), lambda i, j: (i, 0)),
                    pl.BlockSpec((Kp, tn), lambda i, j: (0, j)),
                    pl.BlockSpec((1, tn), lambda i, j: (0, j)),
                ],
                out_specs=pl.BlockSpec((tm, tn), lambda i, j: (i, j)),
            ),
            compiler_params=pltpu.CompilerParams(
                dimension_semantics=("parallel", "parallel"),
                vmem_limit_bytes=_VMEM_LIMIT),
        )(xp, wp, bp)
    else:
        tk = _largest_tile(Kp, 128, 2048)
        out = pl.pallas_call(
            functools.partial(_matmul_acc_kernel, activation=activation),
            out_shape=jax.ShapeDtypeStruct((Mp, Np), jnp.bfloat16),
            grid_spec=pltpu.PrefetchScalarGridSpec(
                num_scalar_prefetch=0,
                grid=(Mp // tm, Np // tn, Kp // tk),
                in_specs=[
                    pl.BlockSpec((tm, tk), lambda i, j, k: (i, k)),
                    pl.BlockSpec((tk, tn), lambda i, j, k: (k, j)),
                    pl.BlockSpec((1, tn), lambda i, j, k: (0, j)),
                ],
                out_specs=pl.BlockSpec((tm, tn), lambda i, j, k: (i, j)),
                scratch_shapes=[pltpu.VMEM((tm, tn), jnp.float32)],
            ),
            compiler_params=pltpu.CompilerParams(
                dimension_semantics=("parallel", "parallel", "arbitrary"),
                vmem_limit_bytes=_VMEM_LIMIT),
        )(xp, wp, bp)

    return out[:M, :n].reshape(orig_shape[:-1] + (n,))


def linear(x, lin, activation="none"):
    return _linear_impl(x, lin["w"], lin["b"], n=lin["n"], activation=activation)


# ---------------------------------------------------------------------------
# Kernel 2: matmul + bias + residual-add + LayerNorm fused epilogue (bf16 out)
# ---------------------------------------------------------------------------
def _matmul_add_ln_kernel(x_ref, w_ref, b_ref, r_ref, g_ref, bt_ref, o_ref, *, eps, valid):
    acc = jnp.dot(x_ref[...], w_ref[...], preferred_element_type=jnp.float32)
    xv = acc + b_ref[...] + r_ref[...].astype(jnp.float32)
    Hp = xv.shape[-1]
    if valid == Hp:
        mu = jnp.mean(xv, axis=-1, keepdims=True)
        xc = xv - mu
        var = jnp.mean(xc * xc, axis=-1, keepdims=True)
    else:
        lane = jax.lax.broadcasted_iota(jnp.int32, xv.shape, 1)
        mask = lane < valid
        xm = jnp.where(mask, xv, 0.0)
        mu = jnp.sum(xm, axis=-1, keepdims=True) / valid
        xc = jnp.where(mask, xv - mu, 0.0)
        var = jnp.sum(xc * xc, axis=-1, keepdims=True) / valid
    y = xc * jax.lax.rsqrt(var + eps)
    o_ref[...] = (y * g_ref[...] + bt_ref[...]).astype(o_ref.dtype)


@functools.partial(jax.jit, static_argnames=("n", "eps"))
def _linear_add_ln_impl(x, wp, bp, res, g, beta, *, n, eps=1e-12):
    """LayerNorm(x @ W + b + res) with gamma/beta, all fused into the matmul epilogue."""
    orig_shape = x.shape
    K = orig_shape[-1]
    Kp, Np = wp.shape
    assert Kp <= _MAX_TK, "fused linear+LN requires a single K step"

    x2 = x.reshape(-1, K).astype(jnp.bfloat16)
    r2 = res.reshape(-1, n).astype(jnp.bfloat16)
    M = x2.shape[0]
    tm = _pick_tm(M)
    Mp = _round_up(M, tm)

    xp = x2 if (Kp == K and Mp == M) else (
        jnp.zeros((Mp, Kp), jnp.bfloat16).at[:M, :K].set(x2))
    rp = r2 if (Np == n and Mp == M) else (
        jnp.zeros((Mp, Np), jnp.bfloat16).at[:M, :n].set(r2))

    out = pl.pallas_call(
        functools.partial(_matmul_add_ln_kernel, eps=eps, valid=n),
        out_shape=jax.ShapeDtypeStruct((Mp, Np), jnp.bfloat16),
        grid_spec=pltpu.PrefetchScalarGridSpec(
            num_scalar_prefetch=0,
            grid=(Mp // tm,),
            in_specs=[
                pl.BlockSpec((tm, Kp), lambda i: (i, 0)),
                pl.BlockSpec((Kp, Np), lambda i: (0, 0)),
                pl.BlockSpec((1, Np), lambda i: (0, 0)),
                pl.BlockSpec((tm, Np), lambda i: (i, 0)),
                pl.BlockSpec((1, Np), lambda i: (0, 0)),
                pl.BlockSpec((1, Np), lambda i: (0, 0)),
            ],
            out_specs=pl.BlockSpec((tm, Np), lambda i: (i, 0)),
        ),
        compiler_params=pltpu.CompilerParams(
            dimension_semantics=("parallel",),
            vmem_limit_bytes=_VMEM_LIMIT),
    )(xp, wp, bp, rp, g, beta)
    return out[:M, :n].reshape(orig_shape[:-1] + (n,))


def linear_add_ln(x, lin, res, ln):
    return _linear_add_ln_impl(x, lin["w"], lin["b"], res, ln["g"], ln["b"], n=lin["n"])


# ---------------------------------------------------------------------------
# Kernel 3: standalone residual add + LayerNorm (residual broadcast over batch)
# Used only for the embedding + positional-embedding LN; the (1, S, H) residual is
# pinned to block 0 by its index_map (never materialized per batch element).
# ---------------------------------------------------------------------------
def _add_ln_kernel(x_ref, r_ref, g_ref, b_ref, o_ref, *, eps, valid):
    x = x_ref[0].astype(jnp.float32) + r_ref[0].astype(jnp.float32)
    Hp = x.shape[-1]
    if valid == Hp:
        mu = jnp.mean(x, axis=-1, keepdims=True)
        xc = x - mu
        var = jnp.mean(xc * xc, axis=-1, keepdims=True)
    else:
        lane = jax.lax.broadcasted_iota(jnp.int32, x.shape, 1)
        mask = lane < valid
        xm = jnp.where(mask, x, 0.0)
        mu = jnp.sum(xm, axis=-1, keepdims=True) / valid
        xc = jnp.where(mask, x - mu, 0.0)
        var = jnp.sum(xc * xc, axis=-1, keepdims=True) / valid
    y = xc * jax.lax.rsqrt(var + eps)
    o_ref[0] = (y * g_ref[...] + b_ref[...]).astype(o_ref.dtype)


@functools.partial(jax.jit, static_argnames=("eps",))
def _add_ln_bcast_impl(x, res, g, b, eps=1e-12):
    """x: (B, S, H) bf16; res: (1, S, H); returns bf16 (B, S, H)."""
    B, S, H = x.shape
    Hp = g.shape[-1]
    Sp = _round_up(S, 8)
    if Sp != S or Hp != H:
        xp = jnp.zeros((B, Sp, Hp), x.dtype).at[:, :S, :H].set(x)
        rp = jnp.zeros((1, Sp, Hp), res.dtype).at[:, :S, :H].set(res)
    else:
        xp, rp = x, res

    out = pl.pallas_call(
        functools.partial(_add_ln_kernel, eps=eps, valid=H),
        out_shape=jax.ShapeDtypeStruct((B, Sp, Hp), jnp.bfloat16),
        grid_spec=pltpu.PrefetchScalarGridSpec(
            num_scalar_prefetch=0,
            grid=(B,),
            in_specs=[
                pl.BlockSpec((1, Sp, Hp), lambda i: (i, 0, 0)),
                pl.BlockSpec((1, Sp, Hp), lambda i: (0, 0, 0)),
                pl.BlockSpec((1, Hp), lambda i: (0, 0)),
                pl.BlockSpec((1, Hp), lambda i: (0, 0)),
            ],
            out_specs=pl.BlockSpec((1, Sp, Hp), lambda i: (i, 0, 0)),
        ),
        compiler_params=pltpu.CompilerParams(
            dimension_semantics=("parallel",),
            vmem_limit_bytes=_VMEM_LIMIT),
    )(xp, rp, g, b)
    return out[:, :S, :H]


# ---------------------------------------------------------------------------
# Kernel 4: softmax attention, one (batch, head) pair per grid step on a
#           lane-dense (Sp, dh) block; EUP reciprocal for the softmax denom.
# ---------------------------------------------------------------------------
def _attn_kernel(q_ref, k_ref, v_ref, o_ref, *, scale, valid_len):
    q = q_ref[0]          # (Sp, dh) bf16
    k = k_ref[0]
    v = v_ref[0]
    s = jax.lax.dot_general(q, k, (((1,), (1,)), ((), ())),
                            preferred_element_type=jnp.float32) * scale
    if valid_len != s.shape[-1]:
        kidx = jax.lax.broadcasted_iota(jnp.int32, s.shape, 1)
        s = jnp.where(kidx < valid_len, s, -1e30)
    m = jnp.max(s, axis=-1, keepdims=True)
    p = jnp.exp(s - m)
    inv = pl.reciprocal(jnp.sum(p, axis=-1, keepdims=True), approx=True)
    ctx = jnp.dot(p.astype(jnp.bfloat16), v,
                  preferred_element_type=jnp.float32) * inv
    o_ref[0] = ctx.astype(o_ref.dtype)


@functools.partial(jax.jit, static_argnames=("num_heads",))
def mha_attention(q, k, v, *, num_heads):
    """q, k, v: (B, S, Hid) with heads packed along the feature dim -> bf16 (B, S, Hid)."""
    B, S, Hid = q.shape
    dh = Hid // num_heads
    scale = 1.0 / math.sqrt(dh)
    Sp = _round_up(S, 8)
    BH = B * num_heads

    def prep(t):
        t = t.astype(jnp.bfloat16).reshape(B, S, num_heads, dh)
        t = jnp.transpose(t, (0, 2, 1, 3)).reshape(BH, S, dh)
        if Sp != S:
            t = jnp.zeros((BH, Sp, dh), jnp.bfloat16).at[:, :S].set(t)
        return t

    qp, kp, vp = prep(q), prep(k), prep(v)
    out = pl.pallas_call(
        functools.partial(_attn_kernel, scale=scale, valid_len=S),
        out_shape=jax.ShapeDtypeStruct((BH, Sp, dh), jnp.bfloat16),
        grid_spec=pltpu.PrefetchScalarGridSpec(
            num_scalar_prefetch=0,
            grid=(BH,),
            in_specs=[pl.BlockSpec((1, Sp, dh), lambda i: (i, 0, 0))] * 3,
            out_specs=pl.BlockSpec((1, Sp, dh), lambda i: (i, 0, 0)),
        ),
        compiler_params=pltpu.CompilerParams(
            dimension_semantics=("parallel",),
            vmem_limit_bytes=_VMEM_LIMIT),
    )(qp, kp, vp)
    out = out[:, :S].reshape(B, num_heads, S, dh)
    return jnp.transpose(out, (0, 2, 1, 3)).reshape(B, S, Hid)


# ---------------------------------------------------------------------------
# Backbone surrogate (NHWC; conv1 -> conv2 -> grid tokens + pooled image feature)
# ---------------------------------------------------------------------------
def conv3x3_s2(x_nhwc, conv, activation="relu"):
    """3x3 / stride-2 / pad-1 conv via NHWC im2col + Pallas matmul (no relayouts)."""
    B = x_nhwc.shape[0]
    C = x_nhwc.shape[-1]
    patches = jax.lax.conv_general_dilated_patches(
        x_nhwc, filter_shape=(3, 3), window_strides=(2, 2),
        padding=((1, 1), (1, 1)),
        dimension_numbers=("NHWC", "HWIO", "NHWC"))          # (B, Ho, Wo, C*9)
    Ho, Wo = patches.shape[1], patches.shape[2]
    y = linear(patches.reshape(B, Ho * Wo, C * 9), conv, activation)
    return y.reshape(B, Ho, Wo, conv["n"])


def backbone_forward(x_nchw, p):
    """Returns (image_feat (B, 2048) bf16, grid_tokens (B, Hg*Wg, 1024) bf16)."""
    x = jnp.transpose(x_nchw, (0, 2, 3, 1))                  # NCHW -> NHWC once (tiny input)
    h1 = conv3x3_s2(x, p["conv1"], "relu")                   # (B, H/2, W/2, 64)
    h2 = conv3x3_s2(h1, p["conv2"], "relu")                  # (B, H/4, W/4, 1024)
    B, Hg, Wg, C = h2.shape
    grid_tokens = h2.reshape(B, Hg * Wg, C)                  # == flatten(2).transpose(1,2)
    pooled = jnp.mean(grid_tokens.astype(jnp.float32), axis=1)
    image_feat = linear(pooled, p["fc"])                     # (B, 2048) bf16
    return image_feat, grid_tokens


# ---------------------------------------------------------------------------
# Graphormer block (embedding + pos emb LN + L transformer layers + cls/residual heads)
# ---------------------------------------------------------------------------
def graphormer_block(x, p, num_heads):
    B, S, _ = x.shape

    emb = linear(x, p["emb"])                                 # (B, S, Hid) bf16
    pos = p["pos_emb"][:S][None]                              # (1, S, Hid) — never tiled to B
    h = _add_ln_bcast_impl(emb, pos, p["emb_ln"]["g"], p["emb_ln"]["b"])

    for lp in p["layers"]:
        qkv = linear(h, lp["qkv"])                            # fused QKV: (B, S, 3*Hid)
        q, k, v = jnp.split(qkv, 3, axis=-1)
        ctx = mha_attention(q, k, v, num_heads=num_heads)     # (B, S, Hid) bf16
        h = linear_add_ln(ctx, lp["o"], h, lp["ln1"])         # o-proj + residual + LN fused

        inter = linear(h, lp["i"], activation="gelu")
        h = linear_add_ln(inter, lp["f"], h, lp["ln2"])       # f-proj + residual + LN fused

    pred = linear(h, p["cls"])
    res = linear(x, p["res"])
    return pred + res


# ---------------------------------------------------------------------------
# EvRGBStereo forward (encoder_based framework, ere_usage = [1, 1, 1])
# ---------------------------------------------------------------------------
NUM_JOINTS = 21
NUM_VERTS_SUB = 195
NUM_REF = NUM_JOINTS + NUM_VERTS_SUB        # 216
NUM_HEADS = 4


def ev_rgb_stereo_forward(params, rgb, l_ev_frame, r_ev_frame):
    batch_size = rgb.shape[0]
    output = {}

    # TODO(synk): MANO + MeshSampler replaced by deterministic template constants.
    template_3d_joints = params["template_joints"]            # (1, 21, 3)
    template_vertices_sub = params["template_verts_sub"]      # (1, 195, 3)
    template_root = template_3d_joints[:, 0, :]
    template_3d_joints = template_3d_joints - template_root[:, None, :]
    template_vertices_sub = template_vertices_sub - template_root[:, None, :]
    ref_vertices = jnp.concatenate([template_3d_joints, template_vertices_sub], axis=1)
    ref_vertices = jnp.broadcast_to(ref_vertices, (batch_size, NUM_REF, 3)).astype(jnp.bfloat16)

    # Left + right event streams share ev_backbone weights -> batch them through one call.
    ev_in = jnp.concatenate([l_ev_frame[:, :2], r_ev_frame[:, :2]], axis=0)   # (2B, 2, H, W)
    img_ev, grid_ev = backbone_forward(ev_in, params["ev_backbone"])
    img_l, img_r = img_ev[:batch_size], img_ev[batch_size:]
    grid_l, grid_r = grid_ev[:batch_size], grid_ev[batch_size:]

    img_rgb, grid_rgb = backbone_forward(rgb, params["rgb_backbone"])

    image_feat = (img_l + img_rgb + img_r) * (1.0 / 3.0)                      # (B, 2048) bf16
    image_feat = jnp.broadcast_to(image_feat[:, None, :], (batch_size, NUM_REF, 2048))

    grid_feat = jnp.concatenate([grid_l, grid_rgb, grid_r], axis=1)           # (B, 3*HgWg, 1024)
    grid_feat = linear(grid_feat, params["grid_feat_dim"])                    # -> (B, 3*HgWg, 2051)

    features = jnp.concatenate([ref_vertices, image_feat], axis=2)            # (B, 216, 2051)
    features = jnp.concatenate([features, grid_feat], axis=1)                 # (B, 216+3*HgWg, 2051)

    for blk in params["trans_encoder"]:
        features = graphormer_block(features, blk, NUM_HEADS)                 # final: (B, S, 3)

    pred_3d_joints = features[:, :NUM_JOINTS, :]
    pred_vertices_sub = features[:, NUM_JOINTS:NUM_JOINTS + NUM_VERTS_SUB, :]
    temp_transpose = jnp.swapaxes(pred_vertices_sub, 1, 2)                    # (B, 3, 195)
    pred_vertices = linear(temp_transpose, params["upsampling"])              # (B, 3, 778)
    pred_vertices = jnp.swapaxes(pred_vertices, 1, 2)                         # (B, 778, 3)

    output["pred_3d_joints"] = pred_3d_joints.astype(jnp.float32)
    output["pred_vertices_sub"] = pred_vertices_sub.astype(jnp.float32)
    output["pred_vertices"] = pred_vertices.astype(jnp.float32)
    return output


# ---------------------------------------------------------------------------
# Deterministic parameter initialization (synthetic weights, no checkpoint).
# Weights are packed ONCE: K padded to 128-multiple, N padded to 256-multiple, bf16;
# biases padded to (1, Np) f32; LN gamma/beta padded to the same 256-multiple.
# ---------------------------------------------------------------------------
def init_params(key):
    keys = iter(jax.random.split(key, 512))

    def nrm(shape, std=0.02):
        return jax.random.normal(next(keys), shape, jnp.float32) * std

    def pack_linear(w, b=None):
        K, N = w.shape
        Kp, Np = _round_up(K, 128), _round_up(N, _ALIGN_N)
        wp = jnp.zeros((Kp, Np), jnp.bfloat16).at[:K, :N].set(w.astype(jnp.bfloat16))
        if b is None:
            b = jnp.zeros((N,), jnp.float32)
        bp = jnp.zeros((1, Np), jnp.float32).at[0, :N].set(b)
        return {"w": wp, "b": bp, "n": int(N)}

    def pack_conv(w):   # (Cout, Cin, kh, kw) -> packed (Cin*kh*kw, Cout), no bias
        Cout = w.shape[0]
        return pack_linear(w.reshape(Cout, -1).T)

    def pack_ln(H):
        Hp = _round_up(H, _ALIGN_N)
        g = jnp.zeros((1, Hp), jnp.float32).at[0, :H].set(1.0)
        b = jnp.zeros((1, Hp), jnp.float32)
        return {"g": g, "b": b}

    # --- backbones (deepcopy semantics: ev shares conv2/fc VALUES, fresh 2-ch conv1) ---
    conv1_rgb = nrm((64, 3, 3, 3), std=math.sqrt(2.0 / (64 * 9)))
    conv2_shared = nrm((1024, 64, 3, 3), std=math.sqrt(2.0 / (1024 * 9)))
    fc_w_shared = nrm((1024, 2048))
    fc_b_shared = jnp.zeros((2048,), jnp.float32)
    rgb_backbone = dict(conv1=pack_conv(conv1_rgb),
                        conv2=pack_conv(conv2_shared),
                        fc=pack_linear(fc_w_shared, fc_b_shared))
    ev_backbone = dict(conv1=pack_conv(nrm((64, 2, 3, 3), std=math.sqrt(2.0 / (64 * 9)))),
                       conv2=pack_conv(conv2_shared),
                       fc=pack_linear(fc_w_shared, fc_b_shared))

    # --- Graphormer blocks ---
    def init_block(din, hid, dout, n_layers):
        inter = 2 * hid
        blk = dict(
            emb=pack_linear(nrm((din, hid))),
            pos_emb=nrm((512, hid)),
            emb_ln=pack_ln(hid),
            cls=pack_linear(nrm((hid, dout))),
            res=pack_linear(nrm((din, dout))),
            layers=[],
        )
        for _ in range(n_layers):
            wq, wk, wv = nrm((hid, hid)), nrm((hid, hid)), nrm((hid, hid))
            blk["layers"].append(dict(
                qkv=pack_linear(jnp.concatenate([wq, wk, wv], axis=1)),   # fused QKV
                o=pack_linear(nrm((hid, hid))),
                ln1=pack_ln(hid),
                i=pack_linear(nrm((hid, inter))),
                f=pack_linear(nrm((inter, hid))),
                ln2=pack_ln(hid),
            ))
        return blk

    # tfm config: input_feat_dim=[2051, 512, 128], hidden_feat_dim=[1024, 256, 64],
    # output_feat_dim=input_feat_dim[1:]+[3], num_hidden_layers=2, heads=4, no graph conv.
    input_feat_dim = [2051, 512, 128]
    hidden_feat_dim = [1024, 256, 64]
    output_feat_dim = input_feat_dim[1:] + [3]
    trans_encoder = [
        init_block(input_feat_dim[i], hidden_feat_dim[i], output_feat_dim[i], n_layers=2)
        for i in range(len(output_feat_dim))
    ]

    return dict(
        rgb_backbone=rgb_backbone,
        ev_backbone=ev_backbone,
        trans_encoder=trans_encoder,
        grid_feat_dim=pack_linear(nrm((1024, 2051))),
        upsampling=pack_linear(nrm((195, 778))),
        template_joints=nrm((1, NUM_JOINTS, 3), std=0.1),
        template_verts_sub=nrm((1, NUM_VERTS_SUB, 3), std=0.1),
    )


if __name__ == "__main__":
    key = jax.random.PRNGKey(0)
    k_p, k_rgb, k_l, k_r = jax.random.split(key, 4)

    params = init_params(k_p)

    B, H, W = 2, 16, 16
    rgb = jax.random.normal(k_rgb, (B, 3, H, W), jnp.float32)        # NCHW
    l_ev_frame = jax.random.normal(k_l, (B, 3, H, W), jnp.float32)   # forward uses [:, :2]
    r_ev_frame = jax.random.normal(k_r, (B, 3, H, W), jnp.float32)

    out = ev_rgb_stereo_forward(params, rgb, l_ev_frame, r_ev_frame)
    out = jax.block_until_ready(out)

    assert out["pred_3d_joints"].shape == (B, 21, 3)
    assert out["pred_vertices_sub"].shape == (B, 195, 3)
    assert out["pred_vertices"].shape == (B, 778, 3)
    assert all(bool(jnp.all(jnp.isfinite(v))) for v in out.values())
    print("KERNEL_OK")
</pallas_src>

<mosaic_0001>
module attributes {stable_mosaic.version = 11 : i64} {
  func.func @_matmul_bias_kernel(%arg0: i32, %arg1: i32, %arg2: memref<256x128xbf16, #tpu.memory_space<vmem>>, %arg3: memref<128x256xbf16, #tpu.memory_space<vmem>>, %arg4: memref<1x256xf32, #tpu.memory_space<vmem>>, %arg5: memref<256x256xbf16, #tpu.memory_space<vmem>>) attributes {dimension_semantics = [#tpu.dimension_semantics<parallel>, #tpu.dimension_semantics<parallel>], iteration_bounds = array<i64: 1, 1>, scalar_prefetch = 0 : i64, scratch_operands = 0 : i64, tpu.core_type = #tpu.core_type<tc>, window_params = [{transform_indices = @transform_0, window_bounds = array<i64: 256, 128>}, {transform_indices = @transform_1, window_bounds = array<i64: 128, 256>}, {transform_indices = @transform_2, window_bounds = array<i64: 1, 256>}, {transform_indices = @transform_3, window_bounds = array<i64: 256, 256>}]} {
    %c0 = arith.constant 0 : index
    %c0_0 = arith.constant 0 : index
    %0 = vector.load %arg2[%c0, %c0_0] : memref<256x128xbf16, #tpu.memory_space<vmem>>, vector<256x128xbf16>
    %c0_1 = arith.constant 0 : index
    %c0_2 = arith.constant 0 : index
    %1 = vector.load %arg3[%c0_1, %c0_2] : memref<128x256xbf16, #tpu.memory_space<vmem>>, vector<128x256xbf16>
    %cst = arith.constant dense<0.000000e+00> : vector<256x256xf32>
    %2 = tpu.matmul %0, %1, %cst {dimension_numbers = #tpu.dot_dimension_numbers<[1], [0], [0], [1], [0, 0, 1, 1], [], []>} : vector<256x128xbf16>, vector<128x256xbf16>, vector<256x256xf32> -> vector<256x256xf32>
    %c0_3 = arith.constant 0 : index
    %c0_4 = arith.constant 0 : index
    %3 = vector.load %arg4[%c0_3, %c0_4] : memref<1x256xf32, #tpu.memory_space<vmem>>, vector<1x256xf32>
    %4 = vector.broadcast %3 : vector<1x256xf32> to vector<256x256xf32>
    %5 = arith.addf %2, %4 : vector<256x256xf32>
    %cst_5 = arith.constant 0.000000e+00 : f32
    %6 = vector.broadcast %cst_5 : f32 to vector<256x256xf32>
    %7 = arith.maximumf %5, %6 : vector<256x256xf32>
    %8 = arith.truncf %7 : vector<256x256xf32> to vector<256x256xbf16>
    %c0_6 = arith.constant 0 : index
    %c0_7 = arith.constant 0 : index
    %9 = vector.load %arg5[%c0_6, %c0_7] : memref<256x256xbf16, #tpu.memory_space<vmem>>, vector<256x256xbf16>
    tpu.vector_store %arg5[%c0_6, %c0_7], %8 {strides = array<i32>} : memref<256x256xbf16, #tpu.memory_space<vmem>>, vector<256x256xbf16>,
    return
  }
  func.func @transform_0(%arg0: i32, %arg1: i32) -> (i32, i32) {
    %c0_i32 = arith.constant 0 : i32
    %c0_i32_0 = arith.constant 0 : i32
    return %arg0, %c0_i32 : i32, i32
  }
  func.func @transform_1(%arg0: i32, %arg1: i32) -> (i32, i32) {
    %c0_i32 = arith.constant 0 : i32
    %c0_i32_0 = arith.constant 0 : i32
    return %c0_i32, %arg1 : i32, i32
  }
  func.func @transform_2(%arg0: i32, %arg1: i32) -> (i32, i32) {
    %c0_i32 = arith.constant 0 : i32
    %c0_i32_0 = arith.constant 0 : i32
    return %c0_i32, %arg1 : i32, i32
  }
  func.func @transform_3(%arg0: i32, %arg1: i32) -> (i32, i32) {
    %c0_i32 = arith.constant 0 : i32
    return %arg0, %arg1 : i32, i32
  }
}

</mosaic_0001>

<llo_original>
// kernel: _linear_impl.1
$region0: #{_linear_impl.1}
  #allocation0 [shape = 'u32[]', space=smem, size = 0x4, offset = 0x4, fixed_abs, tag = 'smem constant byte address 0x4 - core index']
  #allocation1 [shape = 'u32[72,128]{1,0:T(1,128)}', space=vmem, size = 0x9000, scoped, tag = 'internal scratch']
  %s0 = inlined_call_operand.vmem [shape: bf16[256,128], index: 0, kind: input, shape index: {}]
  %s1 = inlined_call_operand.vmem [shape: bf16[128,256], index: 1, kind: input, shape index: {}]
  %s2 = inlined_call_operand.vmem [shape: f32[1,256], index: 2, kind: input, shape index: {}]
  %s3 = inlined_call_operand.vmem [shape: bf16[256,256], index: 3, kind: output, shape index: {}]
  %s4 = sld [smem:[#allocation0]]
  $region22: #{_linear_impl.1} parent=0
    _
  %s6 = ssub.s32 1, %s4
  %s7 = scalar_select 0, %s6, %s4
  // Predicated region
  $region2: #{_linear_impl.1} parent=0 // pred_check
    _
  $region3: #{_linear_impl.1} parent=0 // pred_check_branch
    %9 = sbr.rel (0) target = $region5
  $region4: #{_linear_impl.1} parent=0 // pred_region
    _
  $region5: #{_linear_impl.1} parent=0 // pred_fallthru
    _
  // Predicated region
  $region6: #{_linear_impl.1} parent=0 // pred_check
    _
  $region7: #{_linear_impl.1} parent=0 // pred_check_branch
    %11 = sbr.rel (0) target = $region9
  $region8: #{_linear_impl.1} parent=0 // pred_region
    _
  $region9: #{_linear_impl.1} parent=0 // pred_fallthru
    _
  // Predicated region
  $region10: #{_linear_impl.1} parent=0 // pred_check
    _
  $region11: #{_linear_impl.1} parent=0 // pred_check_branch
    %13 = sbr.rel (0) target = $region13
  $region12: #{_linear_impl.1} parent=0 // pred_region
    _
  $region13: #{_linear_impl.1} parent=0 // pred_fallthru
    _
  %v14 = vld [vmem:[%s0] sm:$0xf]
  %v15 = vld [vmem:[%s0 + $0x4] sm:$0xf]
  %v16 = vld [vmem:[%s0 + $0x8] sm:$0xf]
  %v17 = vld [vmem:[%s0 + $0xc] sm:$0xf]
  %v18 = vld [vmem:[%s0 + $0x10] sm:$0xf]
  %v19 = vld [vmem:[%s0 + $0x14] sm:$0xf]
  %v20 = vld [vmem:[%s0 + $0x18] sm:$0xf]
  %v21 = vld [vmem:[%s0 + $0x1c] sm:$0xf]
  %v22 = vld [vmem:[%s0 + $0x20] sm:$0xf]
  %v23 = vld [vmem:[%s0 + $0x24] sm:$0xf]
  %v24 = vld [vmem:[%s0 + $0x28] sm:$0xf]
  %v25 = vld [vmem:[%s0 + $0x2c] sm:$0xf]
  %v26 = vld [vmem:[%s0 + $0x30] sm:$0xf]
  %v27 = vld [vmem:[%s0 + $0x34] sm:$0xf]
  %v28 = vld [vmem:[%s0 + $0x38] sm:$0xf]
  %v29 = vld [vmem:[%s0 + $0x3c] sm:$0xf]
  %v30 = vld [vmem:[%s0 + $0x40] sm:$0xf]
  %v31 = vld [vmem:[%s0 + $0x44] sm:$0xf]
  %v32 = vld [vmem:[%s0 + $0x48] sm:$0xf]
  %v33 = vld [vmem:[%s0 + $0x4c] sm:$0xf]
  %v34 = vld [vmem:[%s0 + $0x50] sm:$0xf]
  %v35 = vld [vmem:[%s0 + $0x54] sm:$0xf]
  %v36 = vld [vmem:[%s0 + $0x58] sm:$0xf]
  %v37 = vld [vmem:[%s0 + $0x5c] sm:$0xf]
  %v38 = vld [vmem:[%s0 + $0x60] sm:$0xf]
  %v39 = vld [vmem:[%s0 + $0x64] sm:$0xf]
  %v40 = vld [vmem:[%s0 + $0x68] sm:$0xf]
  %v41 = vld [vmem:[%s0 + $0x6c] sm:$0xf]
  %v42 = vld [vmem:[%s0 + $0x70] sm:$0xf]
  %v43 = vld [vmem:[%s0 + $0x74] sm:$0xf]
  %v44 = vld [vmem:[%s0 + $0x78] sm:$0xf]
  %v45 = vld [vmem:[%s0 + $0x7c] sm:$0xf]
  %v46 = vld [vmem:[%s1] sm:$0xff]
  %v47 = vld [vmem:[%s1 + $0x8] sm:$0xff]
  %v48 = vld [vmem:[%s1 + $0x10] sm:$0xff]
  %v49 = vld [vmem:[%s1 + $0x18] sm:$0xff]
  %v50 = vld [vmem:[%s1 + $0x20] sm:$0xff]
  %v51 = vld [vmem:[%s1 + $0x28] sm:$0xff]
  %v52 = vld [vmem:[%s1 + $0x30] sm:$0xff]
  %v53 = vld [vmem:[%s1 + $0x38] sm:$0xff]
  %v54 = vld [vmem:[%s1 + $0x40] sm:$0xff]
  %v55 = vld [vmem:[%s1 + $0x48] sm:$0xff]
  %v56 = vld [vmem:[%s1 + $0x50] sm:$0xff]
  %v57 = vld [vmem:[%s1 + $0x58] sm:$0xff]
  %v58 = vld [vmem:[%s1 + $0x60] sm:$0xff]
  %v59 = vld [vmem:[%s1 + $0x68] sm:$0xff]
  %v60 = vld [vmem:[%s1 + $0x70] sm:$0xff]
  %v61 = vld [vmem:[%s1 + $0x78] sm:$0xff]
  %v62 = vld [vmem:[%s2] sm:$0x3]
  %v64 = vperm.slane %v62, 0
  %v65 = vperm.slane %v62, 1
  %v100 = vunpack.c.l.b16 %v14
  %v101 = vunpack.c.l.b16 %v15
  %v102 = vunpack.c.l.b16 %v16
  %v103 = vunpack.c.l.b16 %v17
  %v104 = vunpack.c.l.b16 %v18
  %v105 = vunpack.c.l.b16 %v19
  %v106 = vunpack.c.l.b16 %v20
  %v107 = vunpack.c.l.b16 %v21
  %v108 = vunpack.c.l.b16 %v22
  %v109 = vunpack.c.l.b16 %v23
  %v110 = vunpack.c.l.b16 %v24
  %v111 = vunpack.c.l.b16 %v25
  %v112 = vunpack.c.l.b16 %v26
  %v113 = vunpack.c.l.b16 %v27
  %v114 = vunpack.c.l.b16 %v28
  %v115 = vunpack.c.l.b16 %v29
  %v116 = vunpack.c.l.b16 %v30
  %v117 = vunpack.c.l.b16 %v31
  %v118 = vunpack.c.l.b16 %v32
  %v119 = vunpack.c.l.b16 %v33
  %v120 = vunpack.c.l.b16 %v34
  %v121 = vunpack.c.l.b16 %v35
  %v122 = vunpack.c.l.b16 %v36
  %v123 = vunpack.c.l.b16 %v37
  %v124 = vunpack.c.l.b16 %v38
  %v125 = vunpack.c.l.b16 %v39
  %v126 = vunpack.c.l.b16 %v40
  %v127 = vunpack.c.l.b16 %v41
  %v128 = vunpack.c.l.b16 %v42
  %v129 = vunpack.c.l.b16 %v43
  %v130 = vunpack.c.l.b16 %v44
  %v131 = vunpack.c.l.b16 %v45
  %v132 = vpack.c.b16 %v101, %v100
  %v133 = vpack.c.b16 %v103, %v102
  %v134 = vpack.c.b16 %v105, %v104
  %v135 = vpack.c.b16 %v107, %v106
  %v136 = vpack.c.b16 %v109, %v108
  %v137 = vpack.c.b16 %v111, %v110
  %v138 = vpack.c.b16 %v113, %v112
  %v139 = vpack.c.b16 %v115, %v114
  %v140 = vpack.c.b16 %v117, %v116
  %v141 = vpack.c.b16 %v119, %v118
  %v142 = vpack.c.b16 %v121, %v120
  %v143 = vpack.c.b16 %v123, %v122
  %v144 = vpack.c.b16 %v125, %v124
  %v145 = vpack.c.b16 %v127, %v126
  %v146 = vpack.c.b16 %v129, %v128
  %v147 = vpack.c.b16 %v131, %v130
  %v180 = vunpack.c.l.b16 %v46
  %v181 = vunpack.c.h.b16 %v46
  %v182 = vunpack.c.l.b16 %v47
  %v183 = vunpack.c.h.b16 %v47
  %v184 = vunpack.c.l.b16 %v48
  %v185 = vunpack.c.h.b16 %v48
  %v186 = vunpack.c.l.b16 %v49
  %v187 = vunpack.c.h.b16 %v49
  %v188 = vunpack.c.l.b16 %v50
  %v189 = vunpack.c.h.b16 %v50
  %v190 = vunpack.c.l.b16 %v51
  %v191 = vunpack.c.h.b16 %v51
  %v192 = vunpack.c.l.b16 %v52
  %v193 = vunpack.c.h.b16 %v52
  %v194 = vunpack.c.l.b16 %v53
  %v195 = vunpack.c.h.b16 %v53
  %v196 = vunpack.c.l.b16 %v54
  %v197 = vunpack.c.h.b16 %v54
  %v198 = vunpack.c.l.b16 %v55
  %v199 = vunpack.c.h.b16 %v55
  %v200 = vunpack.c.l.b16 %v56
  %v201 = vunpack.c.h.b16 %v56
  %v202 = vunpack.c.l.b16 %v57
  %v203 = vunpack.c.h.b16 %v57
  %v204 = vunpack.c.l.b16 %v58
  %v205 = vunpack.c.h.b16 %v58
  %v206 = vunpack.c.l.b16 %v59
  %v207 = vunpack.c.h.b16 %v59
  %v208 = vunpack.c.l.b16 %v60
  %v209 = vunpack.c.h.b16 %v60
  %v210 = vunpack.c.l.b16 %v61
  %v211 = vunpack.c.h.b16 %v61
  %v212 = vpack.c.b16 %v182, %v180
  %v213 = vpack.c.b16 %v183, %v181
  %v214 = vpack.c.b16 %v186, %v184
  %v215 = vpack.c.b16 %v187, %v185
  %v216 = vpack.c.b16 %v190, %v188
  %v217 = vpack.c.b16 %v191, %v189
  %v218 = vpack.c.b16 %v194, %v192
  %v219 = vpack.c.b16 %v195, %v193
  %v220 = vpack.c.b16 %v198, %v196
  %v221 = vpack.c.b16 %v199, %v197
  %v222 = vpack.c.b16 %v202, %v200
  %v223 = vpack.c.b16 %v203, %v201
  %v224 = vpack.c.b16 %v206, %v204
  %v225 = vpack.c.b16 %v207, %v205
  %v226 = vpack.c.b16 %v210, %v208
  %v227 = vpack.c.b16 %v211, %v209
  %244 = vmatpush.bf16.msra.mxu0 %v226
  %245 = vmatpush.bf16.msra.mxu0 %v224
  %246 = vmatpush.bf16.msra.mxu0 %v222
  %247 = vmatpush.bf16.msra.mxu0 %v220
  %248 = vmatpush.bf16.msra.mxu0 %v218
  %249 = vmatpush.bf16.msra.mxu0 %v216
  %250 = vmatpush.bf16.msra.mxu0 %v214
  %251 = vmatpush.bf16.msra.mxu0 %v212
  %252 = vmatmul.bf16.gmra.mxu0 %v132
  %v253 = vpop.f32.mrf.mxu0
  %v254 = vadd.f32 %v64, %v253
  %v255 = vpop.f32.mrf.mxu0
  %v256 = vadd.f32 %v64, %v255
  %257 = vmatmul.bf16.gmra.mxu0 %v133
  %v258 = vpop.f32.mrf.mxu0
  %v259 = vadd.f32 %v64, %v258
  %v260 = vpop.f32.mrf.mxu0
  %v261 = vadd.f32 %v64, %v260
  %262 = vmatmul.bf16.gmra.mxu0 %v134
  %v263 = vpop.f32.mrf.mxu0
  %v264 = vadd.f32 %v64, %v263
  %v265 = vpop.f32.mrf.mxu0
  %v266 = vadd.f32 %v64, %v265
  %267 = vmatmul.bf16.gmra.mxu0 %v135
  %v268 = vpop.f32.mrf.mxu0
  %v269 = vadd.f32 %v64, %v268
  %v270 = vpop.f32.mrf.mxu0
  %v271 = vadd.f32 %v64, %v270
  %272 = vmatmul.bf16.gmra.mxu0 %v136
  %v273 = vpop.f32.mrf.mxu0
  %v274 = vadd.f32 %v64, %v273
  %v275 = vpop.f32.mrf.mxu0
  %v276 = vadd.f32 %v64, %v275
  %277 = vmatmul.bf16.gmra.mxu0 %v137
  %v278 = vpop.f32.mrf.mxu0
  %v279 = vadd.f32 %v64, %v278
  %v280 = vpop.f32.mrf.mxu0
  %v281 = vadd.f32 %v64, %v280
  %282 = vmatmul.bf16.gmra.mxu0 %v138
  %v283 = vpop.f32.mrf.mxu0
  %v284 = vadd.f32 %v64, %v283
  %v285 = vpop.f32.mrf.mxu0
  %v286 = vadd.f32 %v64, %v285
  %287 = vmatmul.bf16.gmra.mxu0 %v139
  %v288 = vpop.f32.mrf.mxu0
  %v289 = vadd.f32 %v64, %v288
  %v290 = vpop.f32.mrf.mxu0
  %v291 = vadd.f32 %v64, %v290
  %292 = vmatmul.bf16.gmra.mxu0 %v140
  %v293 = vpop.f32.mrf.mxu0
  %v294 = vadd.f32 %v64, %v293
  %v295 = vpop.f32.mrf.mxu0
  %v296 = vadd.f32 %v64, %v295
  %297 = vmatmul.bf16.gmra.mxu0 %v141
  %v298 = vpop.f32.mrf.mxu0
  %v299 = vadd.f32 %v64, %v298
  %v300 = vpop.f32.mrf.mxu0
  %v301 = vadd.f32 %v64, %v300
  %302 = vmatmul.bf16.gmra.mxu0 %v142
  %v303 = vpop.f32.mrf.mxu0
  %v304 = vadd.f32 %v64, %v303
  %v305 = vpop.f32.mrf.mxu0
  %v306 = vadd.f32 %v64, %v305
  %307 = vmatmul.bf16.gmra.mxu0 %v143
  %v308 = vpop.f32.mrf.mxu0
  %v309 = vadd.f32 %v64, %v308
  %v310 = vpop.f32.mrf.mxu0
  %v311 = vadd.f32 %v64, %v310
  %312 = vmatmul.bf16.gmra.mxu0 %v144
  %v313 = vpop.f32.mrf.mxu0
  %v314 = vadd.f32 %v64, %v313
  %v315 = vpop.f32.mrf.mxu0
  %v316 = vadd.f32 %v64, %v315
  %317 = vmatmul.bf16.gmra.mxu0 %v145
  %v318 = vpop.f32.mrf.mxu0
  %v319 = vadd.f32 %v64, %v318
  %v320 = vpop.f32.mrf.mxu0
  %v321 = vadd.f32 %v64, %v320
  %322 = vmatmul.bf16.gmra.mxu0 %v146
  %v323 = vpop.f32.mrf.mxu0
  %v324 = vadd.f32 %v64, %v323
  %v325 = vpop.f32.mrf.mxu0
  %v326 = vadd.f32 %v64, %v325
  %327 = vmatmul.bf16.gmra.mxu0 %v147
  %v328 = vpop.f32.mrf.mxu0
  %v329 = vadd.f32 %v64, %v328
  %v330 = vpop.f32.mrf.mxu0
  %v331 = vadd.f32 %v64, %v330
  %332 = vdwg.mxu0
  %333 = vmatpush.bf16.msra.mxu0 %v227
  %334 = vmatpush.bf16.msra.mxu0 %v225
  %335 = vmatpush.bf16.msra.mxu0 %v223
  %336 = vmatpush.bf16.msra.mxu0 %v221
  %337 = vmatpush.bf16.msra.mxu0 %v219
  %338 = vmatpush.bf16.msra.mxu0 %v217
  %339 = vmatpush.bf16.msra.mxu0 %v215
  %340 = vmatpush.bf16.msra.mxu0 %v213
  %341 = vmatmul.bf16.gmra.mxu0 %v132
  %v342 = vpop.f32.mrf.mxu0
  %v343 = vadd.f32 %v65, %v342
  %v344 = vpop.f32.mrf.mxu0
  %v345 = vadd.f32 %v65, %v344
  %346 = vmatmul.bf16.gmra.mxu0 %v133
  %v347 = vpop.f32.mrf.mxu0
  %v348 = vadd.f32 %v65, %v347
  %v349 = vpop.f32.mrf.mxu0
  %v350 = vadd.f32 %v65, %v349
  %351 = vmatmul.bf16.gmra.mxu0 %v134
  %v352 = vpop.f32.mrf.mxu0
  %v353 = vadd.f32 %v65, %v352
  %v354 = vpop.f32.mrf.mxu0
  %v355 = vadd.f32 %v65, %v354
  %356 = vmatmul.bf16.gmra.mxu0 %v135
  %v357 = vpop.f32.mrf.mxu0
  %v358 = vadd.f32 %v65, %v357
  %v359 = vpop.f32.mrf.mxu0
  %v360 = vadd.f32 %v65, %v359
  %361 = vmatmul.bf16.gmra.mxu0 %v136
  %v362 = vpop.f32.mrf.mxu0
  %v363 = vadd.f32 %v65, %v362
  %v364 = vpop.f32.mrf.mxu0
  %v365 = vadd.f32 %v65, %v364
  %366 = vmatmul.bf16.gmra.mxu0 %v137
  %v367 = vpop.f32.mrf.mxu0
  %v368 = vadd.f32 %v65, %v367
  %v369 = vpop.f32.mrf.mxu0
  %v370 = vadd.f32 %v65, %v369
  %371 = vmatmul.bf16.gmra.mxu0 %v138
  %v372 = vpop.f32.mrf.mxu0
  %v373 = vadd.f32 %v65, %v372
  %v374 = vpop.f32.mrf.mxu0
  %v375 = vadd.f32 %v65, %v374
  %376 = vmatmul.bf16.gmra.mxu0 %v139
  %v377 = vpop.f32.mrf.mxu0
  %v378 = vadd.f32 %v65, %v377
  %v379 = vpop.f32.mrf.mxu0
  %v380 = vadd.f32 %v65, %v379
  %381 = vmatmul.bf16.gmra.mxu0 %v140
  %v382 = vpop.f32.mrf.mxu0
  %v383 = vadd.f32 %v65, %v382
  %v384 = vpop.f32.mrf.mxu0
  %v385 = vadd.f32 %v65, %v384
  %386 = vmatmul.bf16.gmra.mxu0 %v141
  %v387 = vpop.f32.mrf.mxu0
  %v388 = vadd.f32 %v65, %v387
  %v389 = vpop.f32.mrf.mxu0
  %v390 = vadd.f32 %v65, %v389
  %391 = vmatmul.bf16.gmra.mxu0 %v142
  %v392 = vpop.f32.mrf.mxu0
  %v393 = vadd.f32 %v65, %v392
  %v394 = vpop.f32.mrf.mxu0
  %v395 = vadd.f32 %v65, %v394
  %396 = vmatmul.bf16.gmra.mxu0 %v143
  %v397 = vpop.f32.mrf.mxu0
  %v398 = vadd.f32 %v65, %v397
  %v399 = vpop.f32.mrf.mxu0
  %v400 = vadd.f32 %v65, %v399
  %401 = vmatmul.bf16.gmra.mxu0 %v144
  %v402 = vpop.f32.mrf.mxu0
  %v403 = vadd.f32 %v65, %v402
  %v404 = vpop.f32.mrf.mxu0
  %v405 = vadd.f32 %v65, %v404
  %406 = vmatmul.bf16.gmra.mxu0 %v145
  %v407 = vpop.f32.mrf.mxu0
  %v408 = vadd.f32 %v65, %v407
  %v409 = vpop.f32.mrf.mxu0
  %v410 = vadd.f32 %v65, %v409
  %411 = vmatmul.bf16.gmra.mxu0 %v146
  %v412 = vpop.f32.mrf.mxu0
  %v413 = vadd.f32 %v65, %v412
  %v414 = vpop.f32.mrf.mxu0
  %v415 = vadd.f32 %v65, %v414
  %416 = vmatmul.bf16.gmra.mxu0 %v147
  %v417 = vpop.f32.mrf.mxu0
  %v418 = vadd.f32 %v65, %v417
  %v419 = vpop.f32.mrf.mxu0
  %v420 = vadd.f32 %v65, %v419
  %421 = vdwg.mxu0
  %v422 = vmax.f32 %v254, 0.0
  %v423 = vmax.f32 %v343, 0.0
  %v424 = vmax.f32 %v256, 0.0
  %v425 = vmax.f32 %v345, 0.0
  %v426 = vmax.f32 %v259, 0.0
  %v427 = vmax.f32 %v348, 0.0
  %v428 = vmax.f32 %v261, 0.0
  %v429 = vmax.f32 %v350, 0.0
  %v430 = vmax.f32 %v264, 0.0
  %v431 = vmax.f32 %v353, 0.0
  %v432 = vmax.f32 %v266, 0.0
  %v433 = vmax.f32 %v355, 0.0
  %v434 = vmax.f32 %v269, 0.0
  %v435 = vmax.f32 %v358, 0.0
  %v436 = vmax.f32 %v271, 0.0
  %v437 = vmax.f32 %v360, 0.0
  %v438 = vmax.f32 %v274, 0.0
  %v439 = vmax.f32 %v363, 0.0
  %v440 = vmax.f32 %v276, 0.0
  %v441 = vmax.f32 %v365, 0.0
  %v442 = vmax.f32 %v279, 0.0
  %v443 = vmax.f32 %v368, 0.0
  %v444 = vmax.f32 %v281, 0.0
  %v445 = vmax.f32 %v370, 0.0
  %v446 = vmax.f32 %v284, 0.0
  %v447 = vmax.f32 %v373, 0.0
  %v448 = vmax.f32 %v286, 0.0
  %v449 = vmax.f32 %v375, 0.0
  %v450 = vmax.f32 %v289, 0.0
  %v451 = vmax.f32 %v378, 0.0
  %v452 = vmax.f32 %v291, 0.0
  %v453 = vmax.f32 %v380, 0.0
  %v454 = vmax.f32 %v294, 0.0
  %v455 = vmax.f32 %v383, 0.0
  %v456 = vmax.f32 %v296, 0.0
  %v457 = vmax.f32 %v385, 0.0
  %v458 = vmax.f32 %v299, 0.0
  %v459 = vmax.f32 %v388, 0.0
  %v460 = vmax.f32 %v301, 0.0
  %v461 = vmax.f32 %v390, 0.0
  %v462 = vmax.f32 %v304, 0.0
  %v463 = vmax.f32 %v393, 0.0
  %v464 = vmax.f32 %v306, 0.0
  %v465 = vmax.f32 %v395, 0.0
  %v466 = vmax.f32 %v309, 0.0
  %v467 = vmax.f32 %v398, 0.0
  %v468 = vmax.f32 %v311, 0.0
  %v469 = vmax.f32 %v400, 0.0
  %v470 = vmax.f32 %v314, 0.0
  %v471 = vmax.f32 %v403, 0.0
  %v472 = vmax.f32 %v316, 0.0
  %v473 = vmax.f32 %v405, 0.0
  %v474 = vmax.f32 %v319, 0.0
  %v475 = vmax.f32 %v408, 0.0
  %v476 = vmax.f32 %v321, 0.0
  %v477 = vmax.f32 %v410, 0.0
  %v478 = vmax.f32 %v324, 0.0
  %v479 = vmax.f32 %v413, 0.0
  %v480 = vmax.f32 %v326, 0.0
  %v481 = vmax.f32 %v415, 0.0
  %v482 = vmax.f32 %v329, 0.0
  %v483 = vmax.f32 %v418, 0.0
  %v484 = vmax.f32 %v331, 0.0
  %v485 = vmax.f32 %v420, 0.0
  %v486 = vpack.c.bf16 %v423, %v422
  %v487 = vpack.c.bf16 %v425, %v424
  %v488 = vpack.c.bf16 %v427, %v426
  %v489 = vpack.c.bf16 %v429, %v428
  %v490 = vpack.c.bf16 %v431, %v430
  %v491 = vpack.c.bf16 %v433, %v432
  %v492 = vpack.c.bf16 %v435, %v434
  %v493 = vpack.c.bf16 %v437, %v436
  %v494 = vpack.c.bf16 %v439, %v438
  %v495 = vpack.c.bf16 %v441, %v440
  %v496 = vpack.c.bf16 %v443, %v442
  %v497 = vpack.c.bf16 %v445, %v444
  %v498 = vpack.c.bf16 %v447, %v446
  %v499 = vpack.c.bf16 %v449, %v448
  %v500 = vpack.c.bf16 %v451, %v450
  %v501 = vpack.c.bf16 %v453, %v452
  %v502 = vpack.c.bf16 %v455, %v454
  %v503 = vpack.c.bf16 %v457, %v456
  %v504 = vpack.c.bf16 %v459, %v458
  %v505 = vpack.c.bf16 %v461, %v460
  %v506 = vpack.c.bf16 %v463, %v462
  %v507 = vpack.c.bf16 %v465, %v464
  %v508 = vpack.c.bf16 %v467, %v466
  %v509 = vpack.c.bf16 %v469, %v468
  %v510 = vpack.c.bf16 %v471, %v470
  %v511 = vpack.c.bf16 %v473, %v472
  %v512 = vpack.c.bf16 %v475, %v474
  %v513 = vpack.c.bf16 %v477, %v476
  %v514 = vpack.c.bf16 %v479, %v478
  %v515 = vpack.c.bf16 %v481, %v480
  %v516 = vpack.c.bf16 %v483, %v482
  %v517 = vpack.c.bf16 %v485, %v484
  %518 = vst [vmem:[%s3] sm:$0xff] %v486
  %519 = vst [vmem:[%s3 + $0x8] sm:$0xff] %v487
  %520 = vst [vmem:[%s3 + $0x10] sm:$0xff] %v488
  %521 = vst [vmem:[%s3 + $0x18] sm:$0xff] %v489
  %522 = vst [vmem:[%s3 + $0x20] sm:$0xff] %v490
  %523 = vst [vmem:[%s3 + $0x28] sm:$0xff] %v491
  %524 = vst [vmem:[%s3 + $0x30] sm:$0xff] %v492
  %525 = vst [vmem:[%s3 + $0x38] sm:$0xff] %v493
  %526 = vst [vmem:[%s3 + $0x40] sm:$0xff] %v494
  %527 = vst [vmem:[%s3 + $0x48] sm:$0xff] %v495
  %528 = vst [vmem:[%s3 + $0x50] sm:$0xff] %v496
  %529 = vst [vmem:[%s3 + $0x58] sm:$0xff] %v497
  %530 = vst [vmem:[%s3 + $0x60] sm:$0xff] %v498
  %531 = vst [vmem:[%s3 + $0x68] sm:$0xff] %v499
  %532 = vst [vmem:[%s3 + $0x70] sm:$0xff] %v500
  %533 = vst [vmem:[%s3 + $0x78] sm:$0xff] %v501
  %534 = vst [vmem:[%s3 + $0x80] sm:$0xff] %v502
  %535 = vst [vmem:[%s3 + $0x88] sm:$0xff] %v503
  %536 = vst [vmem:[%s3 + $0x90] sm:$0xff] %v504
  %537 = vst [vmem:[%s3 + $0x98] sm:$0xff] %v505
  %538 = vst [vmem:[%s3 + $0xa0] sm:$0xff] %v506
  %539 = vst [vmem:[%s3 + $0xa8] sm:$0xff] %v507
  %540 = vst [vmem:[%s3 + $0xb0] sm:$0xff] %v508
  %541 = vst [vmem:[%s3 + $0xb8] sm:$0xff] %v509
  %542 = vst [vmem:[%s3 + $0xc0] sm:$0xff] %v510
  %543 = vst [vmem:[%s3 + $0xc8] sm:$0xff] %v511
  %544 = vst [vmem:[%s3 + $0xd0] sm:$0xff] %v512
  %545 = vst [vmem:[%s3 + $0xd8] sm:$0xff] %v513
  %546 = vst [vmem:[%s3 + $0xe0] sm:$0xff] %v514
  %547 = vst [vmem:[%s3 + $0xe8] sm:$0xff] %v515
  %548 = vst [vmem:[%s3 + $0xf0] sm:$0xff] %v516
  %549 = vst [vmem:[%s3 + $0xf8] sm:$0xff] %v517
  // Predicated region
  $region14: #{_linear_impl.1} parent=0 // pred_check
    _
  $region15: #{_linear_impl.1} parent=0 // pred_check_branch
    %551 = sbr.rel (0) target = $region17
  $region16: #{_linear_impl.1} parent=0 // pred_region
    _
  $region17: #{_linear_impl.1} parent=0 // pred_fallthru
    _
  // Predicated region
  $region18: #{_linear_impl.1} parent=0 // pred_check
    _
  $region19: #{_linear_impl.1} parent=0 // pred_check_branch
    %553 = sbr.rel (0) target = $region21
  $region20: #{_linear_impl.1} parent=0 // pred_region
    _
  $region21: #{_linear_impl.1} parent=0 // pred_fallthru
    _

</llo_original>
